<compile_context>
chip_gen: v7x
topology: tpu7x:2x2x1
jax: 0.10.0
libtpu: 0.0.40
codegen_flags: <defaults>
</compile_context>

<pallas_src>
import math

import jax
import jax.numpy as jnp
from jax import lax
from jax.experimental import pallas as pl
from jax.experimental.pallas import tpu as pltpu


def _round_up(n, m):
    return ((n + m - 1) // m) * m


def _vmem_capacity_bytes():
    """Physical VMEM per core; conservative fallback = v7x's 64 MiB."""
    try:
        cap = getattr(pltpu.get_tpu_info(), "vmem_capacity_bytes", None)
        if cap:
            return int(cap)
    except Exception:
        pass
    return 64 << 20


def _critic_kernel(x_ref,
                   w1_ref, b1_ref,
                   w2_ref, b2_ref,
                   w3_ref, b3_ref,
                   wo_ref, bo_ref,
                   out_ref):
    """Fused 4-layer MLP for one batch tile, computed batch-on-lanes (transposed)."""
    cdt = w1_ref.dtype              # MXU operand dtype (bf16 fast path, f32 otherwise)
    x = x_ref[...].astype(cdt)      # no-op when x already arrives in the weight dtype

    # Layer 1: (H, D) . (block_m, D)^T -> (H, block_m).  The batch lands on the
    # lane axis, so every bias-add / ReLU / cast below runs at 128-lane occupancy.
    h = lax.dot_general(w1_ref[...], x,
                        dimension_numbers=(((1,), (1,)), ((), ())),
                        preferred_element_type=jnp.float32)
    h = jnp.maximum(h + b1_ref[...], 0.0).astype(cdt)   # f32 bias+ReLU (no bf16 VPU on v5e)

    # Layers 2-3: (H, H) @ (H, block_m), lane-dense throughout.
    h = jnp.dot(w2_ref[...], h, preferred_element_type=jnp.float32)
    h = jnp.maximum(h + b2_ref[...], 0.0).astype(cdt)
    h = jnp.dot(w3_ref[...], h, preferred_element_type=jnp.float32)
    h = jnp.maximum(h + b3_ref[...], 0.0).astype(cdt)

    # Value head: (1, H) @ (H, block_m) -> (1, block_m) lane-dense store.
    v = jnp.dot(wo_ref[...], h, preferred_element_type=jnp.float32) + bo_ref[...]
    out_ref[...] = v.astype(out_ref.dtype)


def critic_forward(x, params, *, block_m=None):
    """x: [B, input_dim] (f32 or bf16). params: W as [out, in], b as [out, 1] (biases f32)."""
    B, D = x.shape
    w1, b1 = params["w1"], params["b1"]
    w2, b2 = params["w2"], params["b2"]
    w3, b3 = params["w3"], params["b3"]
    wo, bo = params["wo"], params["bo"]
    H = w1.shape[0]
    assert w1.shape == (H, D) and wo.shape == (1, H)

    # Batch tile: large tiles amortize the ~0.35us/step grid overhead (this kernel
    # is overhead/DMA-bound, not MXU-bound).  Force an even >=2 step count for big
    # batches so v7x's two TensorCores both get work; small batches take one tile.
    if block_m is None:
        if B <= 1024:
            block_m = B
        else:
            steps = pl.cdiv(B, 4096)
            steps += steps % 2                       # even #steps -> dual-TC on v7x
            block_m = _round_up(pl.cdiv(B, steps), 128)
    if block_m >= B:
        block_m = B                                  # single full-extent tile
    else:
        block_m = max(128, _round_up(block_m, 128))  # lane-dense (1, block_m) out blocks
    grid = (pl.cdiv(B, block_m),)                    # ragged edge block masked by Pallas

    # VMEM budget: double-buffered x/out tiles + resident weights (constant
    # index_maps are still double-buffered; ~16 KB here so single-buffering them
    # is deferred to the K-tiled path below) + live f32 activation slabs.
    nbytes = lambda a: a.size * a.dtype.itemsize  # noqa: E731
    w_bytes = sum(nbytes(a) for a in (w1, b1, w2, b2, w3, b3, wo, bo))
    tile_bytes = (2 * block_m * D * x.dtype.itemsize   # x tile, double-buffered
                  + 2 * block_m * 4                    # out tile, double-buffered
                  + 2 * w_bytes                        # weights / biases
                  + 4 * block_m * H * 4)               # in-kernel activation slabs
    vmem_limit = int(min(max(tile_bytes + (4 << 20), 16 << 20),
                         _vmem_capacity_bytes() * 3 // 4))

    const = lambda i: (0, 0)  # noqa: E731 -- whole weight array pinned to block (0, 0)
    # TODO(synk): if hidden_dim grows so the H x H weights no longer fit as one block,
    # K-tile w2/w3 on an 'arbitrary' reduction axis with a VMEM accumulator (and mark
    # the weight BlockSpecs pl.Buffered(1)) instead of shrinking block_m.

    out = pl.pallas_call(
        _critic_kernel,
        out_shape=jax.ShapeDtypeStruct((1, B), jnp.float32),
        grid_spec=pltpu.PrefetchScalarGridSpec(
            num_scalar_prefetch=0,
            grid=grid,
            in_specs=[
                pl.BlockSpec((block_m, D), lambda i: (i, 0)),   # x: natural row-major layout
                pl.BlockSpec((H, D), const),   # w1  [out, in]
                pl.BlockSpec((H, 1), const),   # b1  [out, 1]
                pl.BlockSpec((H, H), const),   # w2
                pl.BlockSpec((H, 1), const),   # b2
                pl.BlockSpec((H, H), const),   # w3
                pl.BlockSpec((H, 1), const),   # b3
                pl.BlockSpec((1, H), const),   # wo
                pl.BlockSpec((1, 1), const),   # bo
            ],
            out_specs=pl.BlockSpec((1, block_m), lambda i: (0, i)),  # lane-dense value row
        ),
        compiler_params=pltpu.CompilerParams(
            dimension_semantics=("parallel",),
            vmem_limit_bytes=vmem_limit),
    )(x, w1, b1, w2, b2, w3, b3, wo, bo)
    return out.reshape(B, 1)   # (1, B) -> (B, 1): pure reshape, matches the module's output


def xavier_uniform(key, fan_out, fan_in):
    """Matches torch.nn.init.xavier_uniform_ (gain=1) on a [out, in] weight."""
    bound = math.sqrt(6.0 / (fan_in + fan_out))
    return jax.random.uniform(key, (fan_out, fan_in), jnp.float32, -bound, bound)


def init_critic_params(key, input_dim, hidden_dim):
    k1, k2, k3, k4 = jax.random.split(key, 4)
    return {
        "w1": xavier_uniform(k1, hidden_dim, input_dim),   # (H, D)
        "b1": jnp.zeros((hidden_dim, 1), jnp.float32),
        "w2": xavier_uniform(k2, hidden_dim, hidden_dim),
        "b2": jnp.zeros((hidden_dim, 1), jnp.float32),
        "w3": xavier_uniform(k3, hidden_dim, hidden_dim),
        "b3": jnp.zeros((hidden_dim, 1), jnp.float32),
        "wo": xavier_uniform(k4, 1, hidden_dim),           # (1, H)
        "bo": jnp.zeros((1, 1), jnp.float32),
    }


def cast_weights(params, dtype):
    """Cast matmul weights to `dtype` (e.g. bf16 for full-rate MXU); biases stay f32."""
    out = dict(params)
    for k in ("w1", "w2", "w3", "wo"):
        out[k] = params[k].astype(dtype)
    return out


def critic_reference(x, p):
    """Pure-JAX reference mirroring the kernel's transposed math and compute dtypes."""
    cdt = p["w1"].dtype
    h = x.astype(cdt)
    h = lax.dot_general(p["w1"], h, (((1,), (1,)), ((), ())),
                        preferred_element_type=jnp.float32)
    h = jax.nn.relu(h + p["b1"]).astype(cdt)
    h = jax.nn.relu(jnp.dot(p["w2"], h, preferred_element_type=jnp.float32) + p["b2"]).astype(cdt)
    h = jax.nn.relu(jnp.dot(p["w3"], h, preferred_element_type=jnp.float32) + p["b3"]).astype(cdt)
    v = jnp.dot(p["wo"], h, preferred_element_type=jnp.float32) + p["bo"]
    return v.T   # (B, 1)


if __name__ == "__main__":
    # Shapes consistent with the module: obs_shape=28, n_agents=4 -> input_dim=32
    obs_shape, n_agents, hidden_dim = 28, 4, 32
    input_dim = obs_shape + n_agents

    key = jax.random.PRNGKey(0)
    pkey, k1, k2, k3 = jax.random.split(key, 4)
    params_f32 = init_critic_params(pkey, input_dim, hidden_dim)

    # 1) f32 semantics (matches the PyTorch module), tiny single-tile batch.
    x_small = jax.random.normal(k1, (8, input_dim), jnp.float32)
    v_small = jax.block_until_ready(critic_forward(x_small, params_f32))
    assert v_small.shape == (8, 1)
    assert jnp.allclose(v_small, critic_reference(x_small, params_f32), atol=1e-4, rtol=1e-4)

    # 2) Optimized path: bf16 weights AND bf16 x (halves the dominant HBM stream),
    #    multi-step parallel grid with a ragged edge block (500 = 3*128 + 116) and
    #    lane-dense (1, block_m) stores.  Tolerance covers bf16 rounding of the
    #    inter-layer activations when MXU/XLA accumulation orders differ.
    params_bf16 = cast_weights(params_f32, jnp.bfloat16)
    x_ragged = jax.random.normal(k2, (500, input_dim), jnp.bfloat16)
    v_ragged = jax.block_until_ready(critic_forward(x_ragged, params_bf16, block_m=128))
    assert v_ragged.shape == (500, 1)
    assert jnp.allclose(v_ragged, critic_reference(x_ragged, params_bf16), atol=1e-2, rtol=1e-2)

    # 3) Default heuristic: even-step grid (dual-TC on v7x), f32 x cast in-kernel.
    x_big = jax.random.normal(k3, (2500, input_dim), jnp.float32)
    v_big = jax.block_until_ready(critic_forward(x_big, params_bf16))
    assert v_big.shape == (2500, 1)
    assert jnp.allclose(v_big, critic_reference(x_big, params_bf16), atol=1e-2, rtol=1e-2)

    print("KERNEL_OK")
</pallas_src>

<mosaic_0001>
module attributes {stable_mosaic.version = 11 : i64} {
  func.func @_critic_kernel(%arg0: i32, %arg1: memref<8x32xf32, #tpu.memory_space<vmem>>, %arg2: memref<32x32xf32, #tpu.memory_space<vmem>>, %arg3: memref<32x1xf32, #tpu.memory_space<vmem>>, %arg4: memref<32x32xf32, #tpu.memory_space<vmem>>, %arg5: memref<32x1xf32, #tpu.memory_space<vmem>>, %arg6: memref<32x32xf32, #tpu.memory_space<vmem>>, %arg7: memref<32x1xf32, #tpu.memory_space<vmem>>, %arg8: memref<1x32xf32, #tpu.memory_space<vmem>>, %arg9: memref<1x1xf32, #tpu.memory_space<vmem>>, %arg10: memref<1x8xf32, #tpu.memory_space<vmem>>) attributes {dimension_semantics = [#tpu.dimension_semantics<parallel>], iteration_bounds = array<i64: 1>, scalar_prefetch = 0 : i64, scratch_operands = 0 : i64, tpu.core_type = #tpu.core_type<tc>, window_params = [{transform_indices = @transform_0, window_bounds = array<i64: 8, 32>}, {pipeline_mode = #tpu.pipeline_mode<synchronous>, transform_indices = @transform_1, window_bounds = array<i64: 32, 32>}, {pipeline_mode = #tpu.pipeline_mode<synchronous>, transform_indices = @transform_2, window_bounds = array<i64: 32, 1>}, {pipeline_mode = #tpu.pipeline_mode<synchronous>, transform_indices = @transform_3, window_bounds = array<i64: 32, 32>}, {pipeline_mode = #tpu.pipeline_mode<synchronous>, transform_indices = @transform_4, window_bounds = array<i64: 32, 1>}, {pipeline_mode = #tpu.pipeline_mode<synchronous>, transform_indices = @transform_5, window_bounds = array<i64: 32, 32>}, {pipeline_mode = #tpu.pipeline_mode<synchronous>, transform_indices = @transform_6, window_bounds = array<i64: 32, 1>}, {pipeline_mode = #tpu.pipeline_mode<synchronous>, transform_indices = @transform_7, window_bounds = array<i64: 1, 32>}, {pipeline_mode = #tpu.pipeline_mode<synchronous>, transform_indices = @transform_8, window_bounds = array<i64: 1, 1>}, {transform_indices = @transform_9, window_bounds = array<i64: 1, 8>}]} {
    %c0 = arith.constant 0 : index
    %c0_0 = arith.constant 0 : index
    %0 = vector.load %arg1[%c0, %c0_0] : memref<8x32xf32, #tpu.memory_space<vmem>>, vector<8x32xf32>
    %c0_1 = arith.constant 0 : index
    %c0_2 = arith.constant 0 : index
    %1 = vector.load %arg2[%c0_1, %c0_2] : memref<32x32xf32, #tpu.memory_space<vmem>>, vector<32x32xf32>
    %cst = arith.constant dense<0.000000e+00> : vector<32x8xf32>
    %2 = tpu.matmul %1, %0, %cst {dimension_numbers = #tpu.dot_dimension_numbers<[1], [1], [0], [0], [0, 0, 1, 0], [], []>} : vector<32x32xf32>, vector<8x32xf32>, vector<32x8xf32> -> vector<32x8xf32>
    %c0_3 = arith.constant 0 : index
    %c0_4 = arith.constant 0 : index
    %3 = vector.load %arg3[%c0_3, %c0_4] : memref<32x1xf32, #tpu.memory_space<vmem>>, vector<32x1xf32>
    %4 = vector.broadcast %3 : vector<32x1xf32> to vector<32x8xf32>
    %5 = arith.addf %2, %4 : vector<32x8xf32>
    %cst_5 = arith.constant 0.000000e+00 : f32
    %6 = vector.broadcast %cst_5 : f32 to vector<32x8xf32>
    %7 = arith.maximumf %5, %6 : vector<32x8xf32>
    %c0_6 = arith.constant 0 : index
    %c0_7 = arith.constant 0 : index
    %8 = vector.load %arg4[%c0_6, %c0_7] : memref<32x32xf32, #tpu.memory_space<vmem>>, vector<32x32xf32>
    %cst_8 = arith.constant dense<0.000000e+00> : vector<32x8xf32>
    %9 = tpu.matmul %8, %7, %cst_8 {dimension_numbers = #tpu.dot_dimension_numbers<[1], [0], [0], [1], [0, 0, 1, 1], [], []>} : vector<32x32xf32>, vector<32x8xf32>, vector<32x8xf32> -> vector<32x8xf32>
    %c0_9 = arith.constant 0 : index
    %c0_10 = arith.constant 0 : index
    %10 = vector.load %arg5[%c0_9, %c0_10] : memref<32x1xf32, #tpu.memory_space<vmem>>, vector<32x1xf32>
    %11 = vector.broadcast %10 : vector<32x1xf32> to vector<32x8xf32>
    %12 = arith.addf %9, %11 : vector<32x8xf32>
    %cst_11 = arith.constant 0.000000e+00 : f32
    %13 = vector.broadcast %cst_11 : f32 to vector<32x8xf32>
    %14 = arith.maximumf %12, %13 : vector<32x8xf32>
    %c0_12 = arith.constant 0 : index
    %c0_13 = arith.constant 0 : index
    %15 = vector.load %arg6[%c0_12, %c0_13] : memref<32x32xf32, #tpu.memory_space<vmem>>, vector<32x32xf32>
    %cst_14 = arith.constant dense<0.000000e+00> : vector<32x8xf32>
    %16 = tpu.matmul %15, %14, %cst_14 {dimension_numbers = #tpu.dot_dimension_numbers<[1], [0], [0], [1], [0, 0, 1, 1], [], []>} : vector<32x32xf32>, vector<32x8xf32>, vector<32x8xf32> -> vector<32x8xf32>
    %c0_15 = arith.constant 0 : index
    %c0_16 = arith.constant 0 : index
    %17 = vector.load %arg7[%c0_15, %c0_16] : memref<32x1xf32, #tpu.memory_space<vmem>>, vector<32x1xf32>
    %18 = vector.broadcast %17 : vector<32x1xf32> to vector<32x8xf32>
    %19 = arith.addf %16, %18 : vector<32x8xf32>
    %cst_17 = arith.constant 0.000000e+00 : f32
    %20 = vector.broadcast %cst_17 : f32 to vector<32x8xf32>
    %21 = arith.maximumf %19, %20 : vector<32x8xf32>
    %c0_18 = arith.constant 0 : index
    %c0_19 = arith.constant 0 : index
    %22 = vector.load %arg8[%c0_18, %c0_19] : memref<1x32xf32, #tpu.memory_space<vmem>>, vector<1x32xf32>
    %cst_20 = arith.constant dense<0.000000e+00> : vector<1x8xf32>
    %23 = tpu.matmul %22, %21, %cst_20 {dimension_numbers = #tpu.dot_dimension_numbers<[1], [0], [0], [1], [0, 0, 1, 1], [], []>} : vector<1x32xf32>, vector<32x8xf32>, vector<1x8xf32> -> vector<1x8xf32>
    %c0_21 = arith.constant 0 : index
    %c0_22 = arith.constant 0 : index
    %24 = vector.load %arg9[%c0_21, %c0_22] : memref<1x1xf32, #tpu.memory_space<vmem>>, vector<1x1xf32>
    %25 = vector.broadcast %24 : vector<1x1xf32> to vector<1x8xf32>
    %26 = arith.addf %23, %25 : vector<1x8xf32>
    %c0_23 = arith.constant 0 : index
    %c0_24 = arith.constant 0 : index
    %27 = vector.load %arg10[%c0_23, %c0_24] : memref<1x8xf32, #tpu.memory_space<vmem>>, vector<1x8xf32>
    tpu.vector_store %arg10[%c0_23, %c0_24], %26 {strides = array<i32>} : memref<1x8xf32, #tpu.memory_space<vmem>>, vector<1x8xf32>,
    return
  }
  func.func @transform_0(%arg0: i32) -> (i32, i32) {
    %c0_i32 = arith.constant 0 : i32
    %c0_i32_0 = arith.constant 0 : i32
    return %arg0, %c0_i32 : i32, i32
  }
  func.func @transform_1(%arg0: i32) -> (i32, i32) {
    %c0_i32 = arith.constant 0 : i32
    %c0_i32_0 = arith.constant 0 : i32
    %c0_i32_1 = arith.constant 0 : i32
    return %c0_i32, %c0_i32_0 : i32, i32
  }
  func.func @transform_2(%arg0: i32) -> (i32, i32) {
    %c0_i32 = arith.constant 0 : i32
    %c0_i32_0 = arith.constant 0 : i32
    %c0_i32_1 = arith.constant 0 : i32
    return %c0_i32, %c0_i32_0 : i32, i32
  }
  func.func @transform_3(%arg0: i32) -> (i32, i32) {
    %c0_i32 = arith.constant 0 : i32
    %c0_i32_0 = arith.constant 0 : i32
    %c0_i32_1 = arith.constant 0 : i32
    return %c0_i32, %c0_i32_0 : i32, i32
  }
  func.func @transform_4(%arg0: i32) -> (i32, i32) {
    %c0_i32 = arith.constant 0 : i32
    %c0_i32_0 = arith.constant 0 : i32
    %c0_i32_1 = arith.constant 0 : i32
    return %c0_i32, %c0_i32_0 : i32, i32
  }
  func.func @transform_5(%arg0: i32) -> (i32, i32) {
    %c0_i32 = arith.constant 0 : i32
    %c0_i32_0 = arith.constant 0 : i32
    %c0_i32_1 = arith.constant 0 : i32
    return %c0_i32, %c0_i32_0 : i32, i32
  }
  func.func @transform_6(%arg0: i32) -> (i32, i32) {
    %c0_i32 = arith.constant 0 : i32
    %c0_i32_0 = arith.constant 0 : i32
    %c0_i32_1 = arith.constant 0 : i32
    return %c0_i32, %c0_i32_0 : i32, i32
  }
  func.func @transform_7(%arg0: i32) -> (i32, i32) {
    %c0_i32 = arith.constant 0 : i32
    %c0_i32_0 = arith.constant 0 : i32
    %c0_i32_1 = arith.constant 0 : i32
    return %c0_i32, %c0_i32_0 : i32, i32
  }
  func.func @transform_8(%arg0: i32) -> (i32, i32) {
    %c0_i32 = arith.constant 0 : i32
    %c0_i32_0 = arith.constant 0 : i32
    %c0_i32_1 = arith.constant 0 : i32
    return %c0_i32, %c0_i32_0 : i32, i32
  }
  func.func @transform_9(%arg0: i32) -> (i32, i32) {
    %c0_i32 = arith.constant 0 : i32
    %c0_i32_0 = arith.constant 0 : i32
    return %c0_i32, %arg0 : i32, i32
  }
}

</mosaic_0001>

<llo_original>
// kernel: tpu_custom_call.1
$region0: #{tpu_custom_call.1}
  #allocation0 [shape = 'u32[]', space=smem, size = 0x4, offset = 0x4, fixed_abs, tag = 'smem constant byte address 0x4 - core index']
  #allocation1 [shape = 'u32[144,128]{1,0:T(1,128)}', space=vmem, size = 0x12000, scoped, tag = 'internal scratch']
  #allocation2 [shape = 'f32[1,1]{1,0:T(1,128)S(1)}', space=vmem, size = 0x200, scoped, tag = 'scoped memory for tpu_custom_call.1']
  %s0 = inlined_call_operand.hbm [shape: f32[8,32], index: 0, kind: input, shape index: {}]
  %s1 = inlined_call_operand.vmem [shape: f32[32,32], index: 1, kind: input, shape index: {}]
  %s2 = inlined_call_operand.vmem [shape: f32[32,1], index: 2, kind: input, shape index: {}]
  %s3 = inlined_call_operand.vmem [shape: f32[32,32], index: 3, kind: input, shape index: {}]
  %s4 = inlined_call_operand.vmem [shape: f32[32,1], index: 4, kind: input, shape index: {}]
  %s5 = inlined_call_operand.vmem [shape: f32[32,32], index: 5, kind: input, shape index: {}]
  %s6 = inlined_call_operand.vmem [shape: f32[32,1], index: 6, kind: input, shape index: {}]
  %s7 = inlined_call_operand.vmem [shape: f32[1,32], index: 7, kind: input, shape index: {}]
  %s8 = inlined_call_operand.<no memory space> [shape: f32[1,1], index: 8, kind: input, shape index: {}]
  %s9 = inlined_call_operand.hbm [shape: f32[1,8], index: 9, kind: output, shape index: {}]
  %s10 = sld [smem:[#allocation0]]
  $region50: #{tpu_custom_call.1} parent=0
    _
  %s12 = ssub.s32 1, %s10
  %s13 = scalar_select 0, %s12, %s10
  %v14 = vstv %s8
  %15 = vst [vmem:[#allocation2] sm:$0x1] %v14
  $region1: #{tpu_custom_call.1} parent=0
    #allocation3 [shape = 'u8[4096]{0}', space=vmem, size = 0x1000, scoped, tag = 'input window, operand 0, single buffered']
    #allocation4 [shape = 's32[1]{0}', space=sflag, size = 0x4, scoped, tag = 'scoped memory for tpu_custom_call.1']
    #allocation5 [shape = 's32[1]{0}', space=sflag, size = 0x4, scoped, tag = 'scoped memory for tpu_custom_call.1']
    #allocation6 [shape = 'u8[512]{0}', space=vmem, size = 0x400, scoped, tag = 'output window, operand 0, single buffered']
    %16 = vsyncpa [#allocation4], 0
    %17 = vsyncpa [#allocation5], 0
    // Predicated region
    $region2: #{tpu_custom_call.1} parent=1 // pred_check
      _
    $region3: #{tpu_custom_call.1} parent=1 // pred_check_branch
      %19 = sbr.rel (0) target = $region5
    $region4: #{tpu_custom_call.1} parent=1 // pred_region
      %s21 = ssub.s32 128, 128
      %22 = vsyncadd [#allocation4], %s21
      %s24 = sshll.u32 [#allocation3], 4
      %s25 = int_to_ptr.vmem [resolvable:$true] %s24
      %27 = dma.hbm_to_vmem [thread:$0]  %s0, 128, %s25, [#allocation4]
    $region5: #{tpu_custom_call.1} parent=1 // pred_fallthru
      _
    // Predicated region
    $region6: #{tpu_custom_call.1} parent=1 // pred_check
      _
    $region7: #{tpu_custom_call.1} parent=1 // pred_check_branch
      %29 = sbr.rel (0) target = $region9
    $region8: #{tpu_custom_call.1} parent=1 // pred_region
      _
    $region9: #{tpu_custom_call.1} parent=1 // pred_fallthru
      _
    // Predicated region
    $region10: #{tpu_custom_call.1} parent=1 // pred_check
      _
    $region11: #{tpu_custom_call.1} parent=1 // pred_check_branch
      %31 = sbr.rel (0) target = $region13
    $region12: #{tpu_custom_call.1} parent=1 // pred_region
      _
    $region13: #{tpu_custom_call.1} parent=1 // pred_fallthru
      _
    // Predicated region
    $region14: #{tpu_custom_call.1} parent=1 // pred_check
      _
    $region15: #{tpu_custom_call.1} parent=1 // pred_check_branch
      %33 = sbr.rel (0) target = $region17
    $region16: #{tpu_custom_call.1} parent=1 // pred_region
      _
    $region17: #{tpu_custom_call.1} parent=1 // pred_fallthru
      _
    // Predicated region
    $region18: #{tpu_custom_call.1} parent=1 // pred_check
      _
    $region19: #{tpu_custom_call.1} parent=1 // pred_check_branch
      %35 = sbr.rel (0) target = $region21
    $region20: #{tpu_custom_call.1} parent=1 // pred_region
      _
    $region21: #{tpu_custom_call.1} parent=1 // pred_fallthru
      _
    // Predicated region
    $region22: #{tpu_custom_call.1} parent=1 // pred_check
      _
    $region23: #{tpu_custom_call.1} parent=1 // pred_check_branch
      %37 = sbr.rel (0) target = $region25
    $region24: #{tpu_custom_call.1} parent=1 // pred_region
      _
    $region25: #{tpu_custom_call.1} parent=1 // pred_fallthru
      _
    // Predicated region
    $region26: #{tpu_custom_call.1} parent=1 // pred_check
      _
    $region27: #{tpu_custom_call.1} parent=1 // pred_check_branch
      %39 = sbr.rel (0) target = $region29
    $region28: #{tpu_custom_call.1} parent=1 // pred_region
      _
    $region29: #{tpu_custom_call.1} parent=1 // pred_fallthru
      _
    // Predicated region
    $region30: #{tpu_custom_call.1} parent=1 // pred_check
      _
    $region31: #{tpu_custom_call.1} parent=1 // pred_check_branch
      %41 = sbr.rel (0) target = $region33
    $region32: #{tpu_custom_call.1} parent=1 // pred_region
      _
    $region33: #{tpu_custom_call.1} parent=1 // pred_fallthru
      _
    // Predicated region
    $region34: #{tpu_custom_call.1} parent=1 // pred_check
      _
    $region35: #{tpu_custom_call.1} parent=1 // pred_check_branch
      %43 = sbr.rel (0) target = $region37
    $region36: #{tpu_custom_call.1} parent=1 // pred_region
      _
    $region37: #{tpu_custom_call.1} parent=1 // pred_fallthru
      _
    // Predicated region
    $region38: #{tpu_custom_call.1} parent=1 // pred_check
      _
    $region39: #{tpu_custom_call.1} parent=1 // pred_check_branch
      %45 = sbr.rel (0) target = $region41
    $region40: #{tpu_custom_call.1} parent=1 // pred_region
      %46 = dma.done [#allocation4], 128
    $region41: #{tpu_custom_call.1} parent=1 // pred_fallthru
      _
    %v47 = vld [vmem:[#allocation3] sm:$0xff]
    %v48 = vld [vmem:[%s1] sm:$0xff]
    %v49 = vld [vmem:[%s1 + $0x8] sm:$0xff]
    %v50 = vld [vmem:[%s1 + $0x10] sm:$0xff]
    %v51 = vld [vmem:[%s1 + $0x18] sm:$0xff]
    %v52 = vld [vmem:[%s2] sm:$0xff]
    %v53 = vld [vmem:[%s2 + $0x8] sm:$0xff]
    %v54 = vld [vmem:[%s2 + $0x10] sm:$0xff]
    %v55 = vld [vmem:[%s2 + $0x18] sm:$0xff]
    %57 = vset.pattern.permute.xlu0 0
    %58 = vperm.xlu0 %57, %v52
    %v59 = vpop.permute.xlu0 %58
    %62 = vset.pattern.permute.xlu0 0
    %63 = vperm.xlu0 %62, %v53
    %v64 = vpop.permute.xlu0 %63
    %67 = vset.pattern.permute.xlu0 0
    %68 = vperm.xlu0 %67, %v54
    %v69 = vpop.permute.xlu0 %68
    %72 = vset.pattern.permute.xlu0 0
    %73 = vperm.xlu0 %72, %v55
    %v74 = vpop.permute.xlu0 %73
    %vm76 = vcmask 261120
    %v78 = vsel %vm76, %v48, 0
    %v81 = vsel %vm76, %v49, 0
    %v84 = vsel %vm76, %v50, 0
    %v87 = vsel %vm76, %v51, 0
    %v90 = vsel %vm76, %v47, 0
    %92 = vmatprep.subr.mxu0 0.0
    %93 = vmatpush1.xpose.msra.mxu0 %v90
    %94 = vmatprep.subr.mxu0 0.0
    %95 = vmatpush1.xpose.msra.mxu0 0.0
    %96 = vmatprep.subr.mxu0 0.0
    %97 = vmatpush1.xpose.msra.mxu0 0.0
    %98 = vmatprep.subr.mxu0 0.0
    %99 = vmatpush1.xpose.msra.mxu0 0.0
    %100 = vmatprep.subr.mxu0 0.0
    %101 = vmatpush1.xpose.msra.mxu0 0.0
    %102 = vmatprep.subr.mxu0 0.0
    %103 = vmatpush1.xpose.msra.mxu0 0.0
    %104 = vmatprep.subr.mxu0 0.0
    %105 = vmatpush1.xpose.msra.mxu0 0.0
    %106 = vmatprep.subr.mxu0 0.0
    %107 = vmatpush1.xpose.msra.mxu0 0.0
    %108 = vmatprep.subr.mxu0 0.0
    %109 = vmatpush1.xpose.msra.mxu0 0.0
    %110 = vmatprep.subr.mxu0 0.0
    %111 = vmatpush1.xpose.msra.mxu0 0.0
    %112 = vmatprep.subr.mxu0 0.0
    %113 = vmatpush1.xpose.msra.mxu0 0.0
    %114 = vmatprep.subr.mxu0 0.0
    %115 = vmatpush1.xpose.msra.mxu0 0.0
    %116 = vmatprep.subr.mxu0 0.0
    %117 = vmatpush1.xpose.msra.mxu0 0.0
    %118 = vmatprep.subr.mxu0 0.0
    %119 = vmatpush1.xpose.msra.mxu0 0.0
    %120 = vmatprep.subr.mxu0 0.0
    %121 = vmatpush1.xpose.msra.mxu0 0.0
    %122 = vmatprep.subr.mxu0 0.0
    %123 = vmatpush1.xpose.msra.mxu0 0.0
    %124 = vmatprep.subr.mxu0 0.0
    %125 = vmatpush1.xpose.msra.mxu0 0.0
    %126 = vmatprep.subr.mxu0 0.0
    %127 = vmatpush1.xpose.msra.mxu0 0.0
    %128 = vmatprep.subr.mxu0 0.0
    %129 = vmatpush1.xpose.msra.mxu0 0.0
    %130 = vmatprep.subr.mxu0 0.0
    %131 = vmatpush1.xpose.msra.mxu0 0.0
    %132 = vmatprep.subr.mxu0 0.0
    %133 = vmatpush1.xpose.msra.mxu0 0.0
    %134 = vmatprep.subr.mxu0 0.0
    %135 = vmatpush1.xpose.msra.mxu0 0.0
    %136 = vmatprep.subr.mxu0 0.0
    %137 = vmatpush1.xpose.msra.mxu0 0.0
    %138 = vmatprep.subr.mxu0 0.0
    %139 = vmatpush1.xpose.msra.mxu0 0.0
    %140 = vmatprep.subr.mxu0 0.0
    %141 = vmatpush1.xpose.msra.mxu0 0.0
    %142 = vmatprep.subr.mxu0 0.0
    %143 = vmatpush1.xpose.msra.mxu0 0.0
    %144 = vmatprep.subr.mxu0 0.0
    %145 = vmatpush1.xpose.msra.mxu0 0.0
    %146 = vmatprep.subr.mxu0 0.0
    %147 = vmatpush1.xpose.msra.mxu0 0.0
    %148 = vmatprep.subr.mxu0 0.0
    %149 = vmatpush1.xpose.msra.mxu0 0.0
    %150 = vmatprep.subr.mxu0 0.0
    %151 = vmatpush1.xpose.msra.mxu0 0.0
    %152 = vmatprep.subr.mxu0 0.0
    %153 = vmatpush1.xpose.msra.mxu0 0.0
    %154 = vmatprep.subr.mxu0 0.0
    %155 = vmatpush1.xpose.msra.mxu0 0.0
    %156 = vmatprep.mubr.f32.mxu0 0.0
    %157 = vmatmul.mubr.f32.gmra.mrb[0].mxu0 %v78
    %v158 = vpop.f32.mrb[0].mxu0
    %v159 = vadd.f32 %v59, %v158
    %v160 = vpop.f32.mrb[0].mxu0
    %161 = vmatprep.mubr.f32.mxu0 0.0
    %162 = vmatmul.mubr.f32.gmra.mrb[0].mxu0 %v81
    %v163 = vpop.f32.mrb[0].mxu0
    %v164 = vadd.f32 %v64, %v163
    %v165 = vpop.f32.mrb[0].mxu0
    %166 = vmatprep.mubr.f32.mxu0 0.0
    %167 = vmatmul.mubr.f32.gmra.mrb[0].mxu0 %v84
    %v168 = vpop.f32.mrb[0].mxu0
    %v169 = vadd.f32 %v69, %v168
    %v170 = vpop.f32.mrb[0].mxu0
    %171 = vmatprep.mubr.f32.mxu0 0.0
    %172 = vmatmul.mubr.f32.gmra.mrb[0].mxu0 %v87
    %v173 = vpop.f32.mrb[0].mxu0
    %v174 = vadd.f32 %v74, %v173
    %v175 = vpop.f32.mrb[0].mxu0
    %176 = vdwg.mxu0
    %v177 = vmax.f32 %v159, 0.0
    %v178 = vmax.f32 %v164, 0.0
    %v179 = vmax.f32 %v169, 0.0
    %v180 = vmax.f32 %v174, 0.0
    %v181 = vld [vmem:[%s3] sm:$0xff]
    %v182 = vld [vmem:[%s3 + $0x8] sm:$0xff]
    %v183 = vld [vmem:[%s3 + $0x10] sm:$0xff]
    %v184 = vld [vmem:[%s3 + $0x18] sm:$0xff]
    %v185 = vld [vmem:[%s4] sm:$0xff]
    %v186 = vld [vmem:[%s4 + $0x8] sm:$0xff]
    %v187 = vld [vmem:[%s4 + $0x10] sm:$0xff]
    %v188 = vld [vmem:[%s4 + $0x18] sm:$0xff]
    %190 = vset.pattern.permute.xlu0 0
    %191 = vperm.xlu0 %190, %v185
    %v192 = vpop.permute.xlu0 %191
    %195 = vset.pattern.permute.xlu0 0
    %196 = vperm.xlu0 %195, %v186
    %v197 = vpop.permute.xlu0 %196
    %200 = vset.pattern.permute.xlu0 0
    %201 = vperm.xlu0 %200, %v187
    %v202 = vpop.permute.xlu0 %201
    %205 = vset.pattern.permute.xlu0 0
    %206 = vperm.xlu0 %205, %v188
    %v207 = vpop.permute.xlu0 %206
    %v210 = vsel %vm76, %v181, 0
    %v213 = vsel %vm76, %v182, 0
    %v216 = vsel %vm76, %v183, 0
    %v219 = vsel %vm76, %v184, 0
    %221 = vmatprep.subr.mxu0 0.0
    %222 = vmatpush1.msra.mxu0 %v177
    %223 = vmatprep.subr.mxu0 0.0
    %224 = vmatpush1.msra.mxu0 %v178
    %225 = vmatprep.subr.mxu0 0.0
    %226 = vmatpush1.msra.mxu0 %v179
    %227 = vmatprep.subr.mxu0 0.0
    %228 = vmatpush1.msra.mxu0 %v180
    %229 = vmatprep.subr.mxu0 0.0
    %230 = vmatpush1.msra.mxu0 0.0
    %231 = vmatprep.subr.mxu0 0.0
    %232 = vmatpush1.msra.mxu0 0.0
    %233 = vmatprep.subr.mxu0 0.0
    %234 = vmatpush1.msra.mxu0 0.0
    %235 = vmatprep.subr.mxu0 0.0
    %236 = vmatpush1.msra.mxu0 0.0
    %237 = vmatprep.subr.mxu0 0.0
    %238 = vmatpush1.msra.mxu0 0.0
    %239 = vmatprep.subr.mxu0 0.0
    %240 = vmatpush1.msra.mxu0 0.0
    %241 = vmatprep.subr.mxu0 0.0
    %242 = vmatpush1.msra.mxu0 0.0
    %243 = vmatprep.subr.mxu0 0.0
    %244 = vmatpush1.msra.mxu0 0.0
    %245 = vmatprep.subr.mxu0 0.0
    %246 = vmatpush1.msra.mxu0 0.0
    %247 = vmatprep.subr.mxu0 0.0
    %248 = vmatpush1.msra.mxu0 0.0
    %249 = vmatprep.subr.mxu0 0.0
    %250 = vmatpush1.msra.mxu0 0.0
    %251 = vmatprep.subr.mxu0 0.0
    %252 = vmatpush1.msra.mxu0 0.0
    %253 = vmatprep.subr.mxu0 0.0
    %254 = vmatpush1.msra.mxu0 0.0
    %255 = vmatprep.subr.mxu0 0.0
    %256 = vmatpush1.msra.mxu0 0.0
    %257 = vmatprep.subr.mxu0 0.0
    %258 = vmatpush1.msra.mxu0 0.0
    %259 = vmatprep.subr.mxu0 0.0
    %260 = vmatpush1.msra.mxu0 0.0
    %261 = vmatprep.subr.mxu0 0.0
    %262 = vmatpush1.msra.mxu0 0.0
    %263 = vmatprep.subr.mxu0 0.0
    %264 = vmatpush1.msra.mxu0 0.0
    %265 = vmatprep.subr.mxu0 0.0
    %266 = vmatpush1.msra.mxu0 0.0
    %267 = vmatprep.subr.mxu0 0.0
    %268 = vmatpush1.msra.mxu0 0.0
    %269 = vmatprep.subr.mxu0 0.0
    %270 = vmatpush1.msra.mxu0 0.0
    %271 = vmatprep.subr.mxu0 0.0
    %272 = vmatpush1.msra.mxu0 0.0
    %273 = vmatprep.subr.mxu0 0.0
    %274 = vmatpush1.msra.mxu0 0.0
    %275 = vmatprep.subr.mxu0 0.0
    %276 = vmatpush1.msra.mxu0 0.0
    %277 = vmatprep.subr.mxu0 0.0
    %278 = vmatpush1.msra.mxu0 0.0
    %279 = vmatprep.subr.mxu0 0.0
    %280 = vmatpush1.msra.mxu0 0.0
    %281 = vmatprep.subr.mxu0 0.0
    %282 = vmatpush1.msra.mxu0 0.0
    %283 = vmatprep.subr.mxu0 0.0
    %284 = vmatpush1.msra.mxu0 0.0
    %285 = vmatprep.mubr.f32.mxu0 0.0
    %286 = vmatmul.mubr.f32.gmra.mrb[0].mxu0 %v210
    %v287 = vpop.f32.mrb[0].mxu0
    %v288 = vadd.f32 %v192, %v287
    %v289 = vpop.f32.mrb[0].mxu0
    %290 = vmatprep.mubr.f32.mxu0 0.0
    %291 = vmatmul.mubr.f32.gmra.mrb[0].mxu0 %v213
    %v292 = vpop.f32.mrb[0].mxu0
    %v293 = vadd.f32 %v197, %v292
    %v294 = vpop.f32.mrb[0].mxu0
    %295 = vmatprep.mubr.f32.mxu0 0.0
    %296 = vmatmul.mubr.f32.gmra.mrb[0].mxu0 %v216
    %v297 = vpop.f32.mrb[0].mxu0
    %v298 = vadd.f32 %v202, %v297
    %v299 = vpop.f32.mrb[0].mxu0
    %300 = vmatprep.mubr.f32.mxu0 0.0
    %301 = vmatmul.mubr.f32.gmra.mrb[0].mxu0 %v219
    %v302 = vpop.f32.mrb[0].mxu0
    %v303 = vadd.f32 %v207, %v302
    %v304 = vpop.f32.mrb[0].mxu0
    %305 = vdwg.mxu0
    %v306 = vmax.f32 %v288, 0.0
    %v307 = vmax.f32 %v293, 0.0
    %v308 = vmax.f32 %v298, 0.0
    %v309 = vmax.f32 %v303, 0.0
    %v310 = vld [vmem:[%s5] sm:$0xff]
    %v311 = vld [vmem:[%s5 + $0x8] sm:$0xff]
    %v312 = vld [vmem:[%s5 + $0x10] sm:$0xff]
    %v313 = vld [vmem:[%s5 + $0x18] sm:$0xff]
    %v314 = vld [vmem:[%s6] sm:$0xff]
    %v315 = vld [vmem:[%s6 + $0x8] sm:$0xff]
    %v316 = vld [vmem:[%s6 + $0x10] sm:$0xff]
    %v317 = vld [vmem:[%s6 + $0x18] sm:$0xff]
    %319 = vset.pattern.permute.xlu0 0
    %320 = vperm.xlu0 %319, %v314
    %v321 = vpop.permute.xlu0 %320
    %324 = vset.pattern.permute.xlu0 0
    %325 = vperm.xlu0 %324, %v315
    %v326 = vpop.permute.xlu0 %325
    %329 = vset.pattern.permute.xlu0 0
    %330 = vperm.xlu0 %329, %v316
    %v331 = vpop.permute.xlu0 %330
    %334 = vset.pattern.permute.xlu0 0
    %335 = vperm.xlu0 %334, %v317
    %v336 = vpop.permute.xlu0 %335
    %v339 = vsel %vm76, %v310, 0
    %v342 = vsel %vm76, %v311, 0
    %v345 = vsel %vm76, %v312, 0
    %v348 = vsel %vm76, %v313, 0
    %350 = vmatprep.subr.mxu0 0.0
    %351 = vmatpush1.msra.mxu0 %v306
    %352 = vmatprep.subr.mxu0 0.0
    %353 = vmatpush1.msra.mxu0 %v307
    %354 = vmatprep.subr.mxu0 0.0
    %355 = vmatpush1.msra.mxu0 %v308
    %356 = vmatprep.subr.mxu0 0.0
    %357 = vmatpush1.msra.mxu0 %v309
    %358 = vmatprep.subr.mxu0 0.0
    %359 = vmatpush1.msra.mxu0 0.0
    %360 = vmatprep.subr.mxu0 0.0
    %361 = vmatpush1.msra.mxu0 0.0
    %362 = vmatprep.subr.mxu0 0.0
    %363 = vmatpush1.msra.mxu0 0.0
    %364 = vmatprep.subr.mxu0 0.0
    %365 = vmatpush1.msra.mxu0 0.0
    %366 = vmatprep.subr.mxu0 0.0
    %367 = vmatpush1.msra.mxu0 0.0
    %368 = vmatprep.subr.mxu0 0.0
    %369 = vmatpush1.msra.mxu0 0.0
    %370 = vmatprep.subr.mxu0 0.0
    %371 = vmatpush1.msra.mxu0 0.0
    %372 = vmatprep.subr.mxu0 0.0
    %373 = vmatpush1.msra.mxu0 0.0
    %374 = vmatprep.subr.mxu0 0.0
    %375 = vmatpush1.msra.mxu0 0.0
    %376 = vmatprep.subr.mxu0 0.0
    %377 = vmatpush1.msra.mxu0 0.0
    %378 = vmatprep.subr.mxu0 0.0
    %379 = vmatpush1.msra.mxu0 0.0
    %380 = vmatprep.subr.mxu0 0.0
    %381 = vmatpush1.msra.mxu0 0.0
    %382 = vmatprep.subr.mxu0 0.0
    %383 = vmatpush1.msra.mxu0 0.0
    %384 = vmatprep.subr.mxu0 0.0
    %385 = vmatpush1.msra.mxu0 0.0
    %386 = vmatprep.subr.mxu0 0.0
    %387 = vmatpush1.msra.mxu0 0.0
    %388 = vmatprep.subr.mxu0 0.0
    %389 = vmatpush1.msra.mxu0 0.0
    %390 = vmatprep.subr.mxu0 0.0
    %391 = vmatpush1.msra.mxu0 0.0
    %392 = vmatprep.subr.mxu0 0.0
    %393 = vmatpush1.msra.mxu0 0.0
    %394 = vmatprep.subr.mxu0 0.0
    %395 = vmatpush1.msra.mxu0 0.0
    %396 = vmatprep.subr.mxu0 0.0
    %397 = vmatpush1.msra.mxu0 0.0
    %398 = vmatprep.subr.mxu0 0.0
    %399 = vmatpush1.msra.mxu0 0.0
    %400 = vmatprep.subr.mxu0 0.0
    %401 = vmatpush1.msra.mxu0 0.0
    %402 = vmatprep.subr.mxu0 0.0
    %403 = vmatpush1.msra.mxu0 0.0
    %404 = vmatprep.subr.mxu0 0.0
    %405 = vmatpush1.msra.mxu0 0.0
    %406 = vmatprep.subr.mxu0 0.0
    %407 = vmatpush1.msra.mxu0 0.0
    %408 = vmatprep.subr.mxu0 0.0
    %409 = vmatpush1.msra.mxu0 0.0
    %410 = vmatprep.subr.mxu0 0.0
    %411 = vmatpush1.msra.mxu0 0.0
    %412 = vmatprep.subr.mxu0 0.0
    %413 = vmatpush1.msra.mxu0 0.0
    %414 = vmatprep.mubr.f32.mxu0 0.0
    %415 = vmatmul.mubr.f32.gmra.mrb[0].mxu0 %v339
    %v416 = vpop.f32.mrb[0].mxu0
    %v417 = vadd.f32 %v321, %v416
    %v418 = vpop.f32.mrb[0].mxu0
    %419 = vmatprep.mubr.f32.mxu0 0.0
    %420 = vmatmul.mubr.f32.gmra.mrb[0].mxu0 %v342
    %v421 = vpop.f32.mrb[0].mxu0
    %v422 = vadd.f32 %v326, %v421
    %v423 = vpop.f32.mrb[0].mxu0
    %424 = vmatprep.mubr.f32.mxu0 0.0
    %425 = vmatmul.mubr.f32.gmra.mrb[0].mxu0 %v345
    %v426 = vpop.f32.mrb[0].mxu0
    %v427 = vadd.f32 %v331, %v426
    %v428 = vpop.f32.mrb[0].mxu0
    %429 = vmatprep.mubr.f32.mxu0 0.0
    %430 = vmatmul.mubr.f32.gmra.mrb[0].mxu0 %v348
    %v431 = vpop.f32.mrb[0].mxu0
    %v432 = vadd.f32 %v336, %v431
    %v433 = vpop.f32.mrb[0].mxu0
    %434 = vdwg.mxu0
    %v435 = vmax.f32 %v417, 0.0
    %v436 = vmax.f32 %v422, 0.0
    %v437 = vmax.f32 %v427, 0.0
    %v438 = vmax.f32 %v432, 0.0
    %v439 = vld [vmem:[%s7] sm:$0x1]
    %v440 = vld [vmem:[#allocation2] sm:$0x1]
    %442 = vset.pattern.permute.xlu0 0
    %443 = vperm.xlu0 %442, %v440
    %v444 = vpop.permute.xlu0 %443
    %v446 = vlaneseq
    %v447 = vshrl.u32 %v446, 7
    %v448 = vsub.s32 0, %v447
    %v449 = vrot.slane %v444, %v448
    %v451 = vsel %vm76, %v439, 0
    %453 = vmatprep.subr.mxu0 0.0
    %454 = vmatpush1.msra.mxu0 %v435
    %455 = vmatprep.subr.mxu0 0.0
    %456 = vmatpush1.msra.mxu0 %v436
    %457 = vmatprep.subr.mxu0 0.0
    %458 = vmatpush1.msra.mxu0 %v437
    %459 = vmatprep.subr.mxu0 0.0
    %460 = vmatpush1.msra.mxu0 %v438
    %461 = vmatprep.subr.mxu0 0.0
    %462 = vmatpush1.msra.mxu0 0.0
    %463 = vmatprep.subr.mxu0 0.0
    %464 = vmatpush1.msra.mxu0 0.0
    %465 = vmatprep.subr.mxu0 0.0
    %466 = vmatpush1.msra.mxu0 0.0
    %467 = vmatprep.subr.mxu0 0.0
    %468 = vmatpush1.msra.mxu0 0.0
    %469 = vmatprep.subr.mxu0 0.0
    %470 = vmatpush1.msra.mxu0 0.0
    %471 = vmatprep.subr.mxu0 0.0
    %472 = vmatpush1.msra.mxu0 0.0
    %473 = vmatprep.subr.mxu0 0.0
    %474 = vmatpush1.msra.mxu0 0.0
    %475 = vmatprep.subr.mxu0 0.0
    %476 = vmatpush1.msra.mxu0 0.0
    %477 = vmatprep.subr.mxu0 0.0
    %478 = vmatpush1.msra.mxu0 0.0
    %479 = vmatprep.subr.mxu0 0.0
    %480 = vmatpush1.msra.mxu0 0.0
    %481 = vmatprep.subr.mxu0 0.0
    %482 = vmatpush1.msra.mxu0 0.0
    %483 = vmatprep.subr.mxu0 0.0
    %484 = vmatpush1.msra.mxu0 0.0
    %485 = vmatprep.subr.mxu0 0.0
    %486 = vmatpush1.msra.mxu0 0.0
    %487 = vmatprep.subr.mxu0 0.0
    %488 = vmatpush1.msra.mxu0 0.0
    %489 = vmatprep.subr.mxu0 0.0
    %490 = vmatpush1.msra.mxu0 0.0
    %491 = vmatprep.subr.mxu0 0.0
    %492 = vmatpush1.msra.mxu0 0.0
    %493 = vmatprep.subr.mxu0 0.0
    %494 = vmatpush1.msra.mxu0 0.0
    %495 = vmatprep.subr.mxu0 0.0
    %496 = vmatpush1.msra.mxu0 0.0
    %497 = vmatprep.subr.mxu0 0.0
    %498 = vmatpush1.msra.mxu0 0.0
    %499 = vmatprep.subr.mxu0 0.0
    %500 = vmatpush1.msra.mxu0 0.0
    %501 = vmatprep.subr.mxu0 0.0
    %502 = vmatpush1.msra.mxu0 0.0
    %503 = vmatprep.subr.mxu0 0.0
    %504 = vmatpush1.msra.mxu0 0.0
    %505 = vmatprep.subr.mxu0 0.0
    %506 = vmatpush1.msra.mxu0 0.0
    %507 = vmatprep.subr.mxu0 0.0
    %508 = vmatpush1.msra.mxu0 0.0
    %509 = vmatprep.subr.mxu0 0.0
    %510 = vmatpush1.msra.mxu0 0.0
    %511 = vmatprep.subr.mxu0 0.0
    %512 = vmatpush1.msra.mxu0 0.0
    %513 = vmatprep.subr.mxu0 0.0
    %514 = vmatpush1.msra.mxu0 0.0
    %515 = vmatprep.subr.mxu0 0.0
    %516 = vmatpush1.msra.mxu0 0.0
    %517 = vmatprep.mubr.f32.mxu0 0.0
    %518 = vmatmul.mubr.f32.gmra.mrb[0].mxu0 %v451
    %v519 = vpop.f32.mrb[0].mxu0
    %v520 = vadd.f32 %v449, %v519
    %v521 = vpop.f32.mrb[0].mxu0
    %522 = vdwg.mxu0
    %vm523 = vcmask 57344
    %524 = vst.msk [vmem:[#allocation6] sm:$0x1] %vm523, %v520
    // Predicated region
    $region42: #{tpu_custom_call.1} parent=1 // pred_check
      _
    $region43: #{tpu_custom_call.1} parent=1 // pred_check_branch
      %526 = sbr.rel (0) target = $region45
    $region44: #{tpu_custom_call.1} parent=1 // pred_region
      %s528 = ssub.s32 16, 16
      %529 = vsyncadd [#allocation5], %s528
      %s531 = sshll.u32 [#allocation6], 4
      %s532 = int_to_ptr.vmem [resolvable:$true] %s531
      %534 = dma.vmem_to_hbm [thread:$0]  %s532, 16, %s9, [#allocation5]
    $region45: #{tpu_custom_call.1} parent=1 // pred_fallthru
      _
    // Predicated region
    $region46: #{tpu_custom_call.1} parent=1 // pred_check
      _
    $region47: #{tpu_custom_call.1} parent=1 // pred_check_branch
      %536 = sbr.rel (0) target = $region49
    $region48: #{tpu_custom_call.1} parent=1 // pred_region
      %537 = dma.done [#allocation5], 16
    $region49: #{tpu_custom_call.1} parent=1 // pred_fallthru
      _
    %538 = vsyncpa [#allocation4], 1
    %539 = vsyncpa [#allocation5], 1

</llo_original>
